<compile_context>
chip_gen: v6e
topology: v6e:2x2x1
jax: 0.10.0
libtpu: 0.0.40
codegen_flags: <defaults>
</compile_context>

<pallas_src>
import functools

import jax
import jax.numpy as jnp
from jax.experimental import pallas as pl
from jax.experimental.pallas import tpu as pltpu


def _round_up(x, m):
    return ((x + m - 1) // m) * m


def _layer_dims(sizes, z_dim):
    """Static per-layer (K, N) extents inside the packed slabs."""
    H = len(sizes) - 1
    s0 = sizes[0]
    ps = [_round_up(s, 128) for s in sizes]
    pad_out = _round_up(s0 + 2 * z_dim, 128)          # x_hat | logvar | mu lanes
    kn = [(s0 + z_dim, ps[1])]                        # enc layer 0 reads fused [x|eps]
    for l in range(1, H):
        kn.append((ps[l], ps[l + 1]))
    kn.append((ps[H], pad_out))                       # fused [logvar|mu] head
    kn.append((pad_out, ps[H]))                       # z2hidden (doubly packed W_z rows)
    for j in reversed(range(H)):
        kn.append((ps[j + 1], pad_out if j == 0 else ps[j]))
    S = max(max(ps), pad_out)                         # square slab extent (mult of 128)
    return tuple(kn), pad_out, S


# ---------------------------------------------------------------------------
# Kernel
# ---------------------------------------------------------------------------
def _vae_kernel(xe_ref, w_ref, b_ref, out_ref, *, n_enc, z_dim, in_dim, layer_kn):
    tb = xe_ref.shape[0]
    pad_out = layer_kn[n_enc][1]

    def linear(h, l):
        k, n = layer_kn[l]                             # static per-layer extents
        return (jnp.dot(h.astype(jnp.bfloat16), w_ref[l, :k, :n],
                        preferred_element_type=jnp.float32)
                + b_ref[l, :, :n])

    # ---- encoder: (Linear -> ReLU) * n_enc.  Layer 0 consumes the fused
    #      [x | eps] tile; the eps lanes hit zero weight rows (exact). ----
    xe = xe_ref[...]
    h = xe
    for l in range(n_enc):
        h = jnp.maximum(linear(h, l), 0.0)

    # ---- fused head: lanes [in_dim, in_dim+z) = logvar, [in_dim+z, in_dim+2z) = mu ----
    mulv = linear(h, n_enc)

    # ---- reparameterize, full-width (no narrow-lane slices, no roll):
    #   mu_part : mu kept on its own lanes, everything else zeroed
    #   noise   : eps * exp(0.5*logvar) on the logvar lanes (eps rides in xe)
    #   The z2hidden slab carries W_z^T under BOTH lane blocks, so
    #   mu_part @ W + noise @ W == (mu + eps*std) @ W_z == z @ W_z exactly. ----
    lane = jax.lax.broadcasted_iota(jnp.int32, (tb, pad_out), 1)
    lane_e = jax.lax.broadcasted_iota(jnp.int32, (tb, in_dim + z_dim), 1)
    mu_part = jnp.where(lane >= in_dim + z_dim, mulv, 0.0)
    noise = (jnp.where(lane_e >= in_dim, xe, 0.0)
             * jnp.exp(0.5 * mulv[:, :in_dim + z_dim]))

    kz, nz = layer_kn[n_enc + 1]
    h = (jnp.dot(mu_part.astype(jnp.bfloat16), w_ref[n_enc + 1, :kz, :nz],
                 preferred_element_type=jnp.float32)
         + jnp.dot(noise.astype(jnp.bfloat16), w_ref[n_enc + 1, :in_dim + z_dim, :nz],
                   preferred_element_type=jnp.float32)
         + b_ref[n_enc + 1, :, :nz])

    # ---- decoder: (ReLU -> Linear) * n_enc, then Sigmoid ----
    for l in range(n_enc + 2, 2 * n_enc + 2):
        h = linear(jnp.maximum(h, 0.0), l)

    # ---- single lane-dense output: x_hat on [0,in_dim), logvar|mu above it ----
    out_ref[...] = jnp.where(lane < in_dim, jax.nn.sigmoid(h), mulv)


# ---------------------------------------------------------------------------
# Parameter init (PyTorch-style, weights stored as (out, in)) and packing
# ---------------------------------------------------------------------------
def init_vae_params(key, sizes, z_dim):
    params = {}

    def linear_init(k, fan_in, fan_out):
        kw, kb = jax.random.split(k)
        bound = 1.0 / jnp.sqrt(fan_in)
        w = jax.random.uniform(kw, (fan_out, fan_in), jnp.float32, -bound, bound)
        b = jax.random.uniform(kb, (fan_out,), jnp.float32, -bound, bound)
        return w, b

    n_enc = len(sizes) - 1
    keys = jax.random.split(key, 2 * n_enc + 3)
    ki = 0

    params["enc"] = []
    for i in range(n_enc):
        params["enc"].append(linear_init(keys[ki], sizes[i], sizes[i + 1])); ki += 1
    params["mu"] = linear_init(keys[ki], sizes[-1], z_dim); ki += 1
    params["logvar"] = linear_init(keys[ki], sizes[-1], z_dim); ki += 1
    params["z2hidden"] = linear_init(keys[ki], z_dim, sizes[-1]); ki += 1
    params["dec"] = []
    for i in reversed(range(n_enc)):
        params["dec"].append(linear_init(keys[ki], sizes[i + 1], sizes[i])); ki += 1
    return params


def pack_vae_params(params, sizes, z_dim):
    """One-time packing: transpose to (in,out), place at static offsets, bf16 weights."""
    s0 = sizes[0]
    H = len(sizes) - 1
    _, _, S = _layer_dims(sizes, z_dim)
    L = 2 * H + 2
    w = jnp.zeros((L, S, S), jnp.float32)
    b = jnp.zeros((L, 1, S), jnp.float32)

    l = 0
    for (wi, bi) in params["enc"]:
        wt = jnp.asarray(wi, jnp.float32).T
        w = w.at[l, :wt.shape[0], :wt.shape[1]].set(wt)
        b = b.at[l, 0, :bi.shape[0]].set(jnp.asarray(bi, jnp.float32))
        l += 1

    # fused head: logvar at cols [s0, s0+z), mu at cols [s0+z, s0+2z)
    (wmu, bmu) = params["mu"]
    (wlv, blv) = params["logvar"]
    wlt = jnp.asarray(wlv, jnp.float32).T
    wmt = jnp.asarray(wmu, jnp.float32).T
    w = w.at[l, :wlt.shape[0], s0:s0 + z_dim].set(wlt)
    w = w.at[l, :wmt.shape[0], s0 + z_dim:s0 + 2 * z_dim].set(wmt)
    b = b.at[l, 0, s0:s0 + z_dim].set(jnp.asarray(blv, jnp.float32))
    b = b.at[l, 0, s0 + z_dim:s0 + 2 * z_dim].set(jnp.asarray(bmu, jnp.float32))
    l += 1

    # z2hidden: W_z^T packed under BOTH lane blocks [s0,s0+z) and [s0+z,s0+2z)
    (wz, bz) = params["z2hidden"]
    wzt = jnp.asarray(wz, jnp.float32).T
    w = w.at[l, s0:s0 + z_dim, :wzt.shape[1]].set(wzt)
    w = w.at[l, s0 + z_dim:s0 + 2 * z_dim, :wzt.shape[1]].set(wzt)
    b = b.at[l, 0, :bz.shape[0]].set(jnp.asarray(bz, jnp.float32))
    l += 1

    for (wi, bi) in params["dec"]:
        wt = jnp.asarray(wi, jnp.float32).T
        w = w.at[l, :wt.shape[0], :wt.shape[1]].set(wt)
        b = b.at[l, 0, :bi.shape[0]].set(jnp.asarray(bi, jnp.float32))
        l += 1

    return w.astype(jnp.bfloat16), b   # bf16 MXU operands; f32 biases


# ---------------------------------------------------------------------------
# Forward (jitted wrapper around a single pallas_call)
# ---------------------------------------------------------------------------
@functools.partial(jax.jit, static_argnames=("sizes", "z_dim", "block_b"))
def vae_forward(x, eps, w_slab, b_slab, *, sizes, z_dim, block_b=512):
    """Returns (x_hat, mu, logvar)."""
    B, in_dim = x.shape
    n_enc = len(sizes) - 1
    assert in_dim == sizes[0] and eps.shape == (B, z_dim)
    layer_kn, pad_out, S = _layer_dims(sizes, z_dim)
    n_layers = 2 * n_enc + 2

    # Fuse eps into the trailing lanes of x: one unpadded input stream,
    # no lane-padded HBM copy of the inputs.
    xe = jnp.concatenate([x.astype(jnp.float32), eps.astype(jnp.float32)], axis=1)

    # Batch tile: multiple of 8; prefer >= 2 grid steps so v7x megacore can
    # shard the "parallel" batch axis across both TensorCores.
    TB = min(block_b, _round_up(B, 8))
    if TB > 8 and _round_up(B, TB) // TB < 2:
        TB = _round_up(pl.cdiv(B, 2), 8)
    B_pad = _round_up(B, TB)
    if B_pad != B:
        xe = jnp.pad(xe, ((0, B_pad - B), (0, 0)))

    kernel = functools.partial(_vae_kernel, n_enc=n_enc, z_dim=z_dim,
                               in_dim=in_dim, layer_kn=layer_kn)

    # VMEM budget: resident (double-buffered) slabs + I/O tiles + headroom.
    slab_bytes = (w_slab.size * w_slab.dtype.itemsize
                  + b_slab.size * b_slab.dtype.itemsize)
    tile_bytes = 4 * TB * (in_dim + z_dim + pad_out)
    vmem_limit = int(min(max(4 * slab_bytes + 4 * tile_bytes + (8 << 20),
                             32 << 20), 64 << 20))

    out = pl.pallas_call(
        kernel,
        out_shape=jax.ShapeDtypeStruct((B_pad, pad_out), jnp.float32),
        grid_spec=pltpu.PrefetchScalarGridSpec(
            num_scalar_prefetch=0,
            grid=(B_pad // TB,),
            in_specs=[
                pl.BlockSpec((TB, in_dim + z_dim), lambda i: (i, 0)),   # fused [x|eps]
                # Constant index_map -> slabs DMA'd once, VMEM-resident across
                # all batch tiles.  (For large slabs, pipeline_mode=pl.Buffered(1)
                # would additionally drop the second buffer.)
                pl.BlockSpec((n_layers, S, S), lambda i: (0, 0, 0)),
                pl.BlockSpec((n_layers, 1, S), lambda i: (0, 0, 0)),
            ],
            out_specs=pl.BlockSpec((TB, pad_out), lambda i: (i, 0)),
        ),
        compiler_params=pltpu.CompilerParams(
            dimension_semantics=("parallel",),
            vmem_limit_bytes=vmem_limit,
        ),
    )(xe, w_slab, b_slab)

    x_hat = out[:B, :in_dim]
    logvar = out[:B, in_dim:in_dim + z_dim]
    mu = out[:B, in_dim + z_dim:in_dim + 2 * z_dim]
    return x_hat, mu, logvar


# ---------------------------------------------------------------------------
# Pure-JAX reference (matches the PyTorch module, f32) for verification
# ---------------------------------------------------------------------------
def vae_forward_ref(x, eps, params):
    h = x
    for w, b in params["enc"]:
        h = jnp.maximum(h @ w.T + b, 0.0)
    mu = h @ params["mu"][0].T + params["mu"][1]
    logvar = h @ params["logvar"][0].T + params["logvar"][1]
    z = mu + eps * jnp.exp(0.5 * logvar)
    h = z @ params["z2hidden"][0].T + params["z2hidden"][1]
    for w, b in params["dec"]:
        h = jnp.maximum(h, 0.0) @ w.T + b
    return jax.nn.sigmoid(h), mu, logvar


if __name__ == "__main__":
    sizes = (64, 48, 32)   # input dim -> hidden dims
    z_dim = 16
    B = 8

    key = jax.random.PRNGKey(0)
    k_param, k_x, k_eps = jax.random.split(key, 3)

    params = init_vae_params(k_param, sizes, z_dim)
    w_slab, b_slab = pack_vae_params(params, sizes, z_dim)   # one-time packing (bf16)

    x = jax.random.uniform(k_x, (B, sizes[0]), jnp.float32)   # VAE inputs in [0,1]
    eps = jax.random.normal(k_eps, (B, z_dim), jnp.float32)   # reparam noise

    x_hat, mu, logvar = jax.block_until_ready(
        vae_forward(x, eps, w_slab, b_slab, sizes=sizes, z_dim=z_dim))

    x_hat_r, mu_r, logvar_r = vae_forward_ref(x, eps, params)
    assert x_hat.shape == (B, sizes[0]) and mu.shape == (B, z_dim) and logvar.shape == (B, z_dim)
    # bf16 MXU operands -> relaxed tolerance vs the f32 reference.
    assert jnp.allclose(x_hat, x_hat_r, atol=2e-2, rtol=2e-2)
    assert jnp.allclose(mu, mu_r, atol=2e-2, rtol=2e-2)
    assert jnp.allclose(logvar, logvar_r, atol=2e-2, rtol=2e-2)

    # Second check: multi-tile grid + batch not a multiple of the tile.
    B2 = 40
    x2 = jax.random.uniform(jax.random.PRNGKey(1), (B2, sizes[0]), jnp.float32)
    eps2 = jax.random.normal(jax.random.PRNGKey(2), (B2, z_dim), jnp.float32)
    got2 = jax.block_until_ready(
        vae_forward(x2, eps2, w_slab, b_slab, sizes=sizes, z_dim=z_dim, block_b=16))
    ref2 = vae_forward_ref(x2, eps2, params)
    for got, ref in zip(got2, ref2):
        assert jnp.allclose(got, ref, atol=2e-2, rtol=2e-2)

    print("KERNEL_OK")
</pallas_src>

<mosaic_0001>
module attributes {stable_mosaic.version = 11 : i64} {
  func.func @_vae_kernel(%arg0: i32, %arg1: memref<8x80xf32, #tpu.memory_space<vmem>>, %arg2: memref<6x128x128xbf16, #tpu.memory_space<vmem>>, %arg3: memref<6x1x128xf32, #tpu.memory_space<vmem>>, %arg4: memref<8x128xf32, #tpu.memory_space<vmem>>) attributes {dimension_semantics = [#tpu.dimension_semantics<parallel>], iteration_bounds = array<i64: 1>, scalar_prefetch = 0 : i64, scratch_operands = 0 : i64, tpu.core_type = #tpu.core_type<tc>, window_params = [{transform_indices = @transform_0, window_bounds = array<i64: 8, 80>}, {pipeline_mode = #tpu.pipeline_mode<synchronous>, transform_indices = @transform_1, window_bounds = array<i64: 6, 128, 128>}, {pipeline_mode = #tpu.pipeline_mode<synchronous>, transform_indices = @transform_2, window_bounds = array<i64: 6, 1, 128>}, {transform_indices = @transform_3, window_bounds = array<i64: 8, 128>}]} {
    %c0 = arith.constant 0 : index
    %c0_0 = arith.constant 0 : index
    %0 = vector.load %arg1[%c0, %c0_0] : memref<8x80xf32, #tpu.memory_space<vmem>>, vector<8x80xf32>
    %1 = arith.truncf %0 : vector<8x80xf32> to vector<8x80xbf16>
    %c0_1 = arith.constant 0 : index
    %c0_2 = arith.constant 0 : index
    %c0_3 = arith.constant 0 : index
    %2 = vector.load %arg2[%c0_1, %c0_2, %c0_3] : memref<6x128x128xbf16, #tpu.memory_space<vmem>>, vector<1x80x128xbf16>
    %3 = vector.shape_cast %2 : vector<1x80x128xbf16> to vector<80x128xbf16>
    %cst = arith.constant dense<0.000000e+00> : vector<8x128xf32>
    %4 = tpu.matmul %1, %3, %cst {dimension_numbers = #tpu.dot_dimension_numbers<[1], [0], [0], [1], [0, 0, 1, 1], [], []>} : vector<8x80xbf16>, vector<80x128xbf16>, vector<8x128xf32> -> vector<8x128xf32>
    %c0_4 = arith.constant 0 : index
    %c0_5 = arith.constant 0 : index
    %c0_6 = arith.constant 0 : index
    %5 = vector.load %arg3[%c0_4, %c0_5, %c0_6] : memref<6x1x128xf32, #tpu.memory_space<vmem>>, vector<1x1x128xf32>
    %6 = vector.shape_cast %5 : vector<1x1x128xf32> to vector<1x128xf32>
    %7 = vector.broadcast %6 : vector<1x128xf32> to vector<8x128xf32>
    %8 = arith.addf %4, %7 : vector<8x128xf32>
    %cst_7 = arith.constant 0.000000e+00 : f32
    %9 = vector.broadcast %cst_7 : f32 to vector<8x128xf32>
    %10 = arith.maximumf %8, %9 : vector<8x128xf32>
    %11 = arith.truncf %10 : vector<8x128xf32> to vector<8x128xbf16>
    %c1 = arith.constant 1 : index
    %c0_8 = arith.constant 0 : index
    %c0_9 = arith.constant 0 : index
    %12 = vector.load %arg2[%c1, %c0_8, %c0_9] : memref<6x128x128xbf16, #tpu.memory_space<vmem>>, vector<1x128x128xbf16>
    %13 = vector.shape_cast %12 : vector<1x128x128xbf16> to vector<128x128xbf16>
    %cst_10 = arith.constant dense<0.000000e+00> : vector<8x128xf32>
    %14 = tpu.matmul %11, %13, %cst_10 {dimension_numbers = #tpu.dot_dimension_numbers<[1], [0], [0], [1], [0, 0, 1, 1], [], []>} : vector<8x128xbf16>, vector<128x128xbf16>, vector<8x128xf32> -> vector<8x128xf32>
    %c1_11 = arith.constant 1 : index
    %c0_12 = arith.constant 0 : index
    %c0_13 = arith.constant 0 : index
    %15 = vector.load %arg3[%c1_11, %c0_12, %c0_13] : memref<6x1x128xf32, #tpu.memory_space<vmem>>, vector<1x1x128xf32>
    %16 = vector.shape_cast %15 : vector<1x1x128xf32> to vector<1x128xf32>
    %17 = vector.broadcast %16 : vector<1x128xf32> to vector<8x128xf32>
    %18 = arith.addf %14, %17 : vector<8x128xf32>
    %cst_14 = arith.constant 0.000000e+00 : f32
    %19 = vector.broadcast %cst_14 : f32 to vector<8x128xf32>
    %20 = arith.maximumf %18, %19 : vector<8x128xf32>
    %21 = arith.truncf %20 : vector<8x128xf32> to vector<8x128xbf16>
    %c2 = arith.constant 2 : index
    %c0_15 = arith.constant 0 : index
    %c0_16 = arith.constant 0 : index
    %22 = vector.load %arg2[%c2, %c0_15, %c0_16] : memref<6x128x128xbf16, #tpu.memory_space<vmem>>, vector<1x128x128xbf16>
    %23 = vector.shape_cast %22 : vector<1x128x128xbf16> to vector<128x128xbf16>
    %cst_17 = arith.constant dense<0.000000e+00> : vector<8x128xf32>
    %24 = tpu.matmul %21, %23, %cst_17 {dimension_numbers = #tpu.dot_dimension_numbers<[1], [0], [0], [1], [0, 0, 1, 1], [], []>} : vector<8x128xbf16>, vector<128x128xbf16>, vector<8x128xf32> -> vector<8x128xf32>
    %c2_18 = arith.constant 2 : index
    %c0_19 = arith.constant 0 : index
    %c0_20 = arith.constant 0 : index
    %25 = vector.load %arg3[%c2_18, %c0_19, %c0_20] : memref<6x1x128xf32, #tpu.memory_space<vmem>>, vector<1x1x128xf32>
    %26 = vector.shape_cast %25 : vector<1x1x128xf32> to vector<1x128xf32>
    %27 = vector.broadcast %26 : vector<1x128xf32> to vector<8x128xf32>
    %28 = arith.addf %24, %27 : vector<8x128xf32>
    %29 = tpu.iota {dimensions = array<i32: 1>} : vector<8x128xi32>
    %30 = tpu.iota {dimensions = array<i32: 1>} : vector<8x80xi32>
    %c80_i32 = arith.constant 80 : i32
    %31 = vector.broadcast %c80_i32 : i32 to vector<8x128xi32>
    %32 = arith.cmpi sge, %29, %31 : vector<8x128xi32>
    %cst_21 = arith.constant 0.000000e+00 : f32
    %33 = vector.broadcast %cst_21 : f32 to vector<8x128xf32>
    %34 = arith.select %32, %28, %33 : vector<8x128xi1>, vector<8x128xf32>
    %c64_i32 = arith.constant 64 : i32
    %35 = vector.broadcast %c64_i32 : i32 to vector<8x80xi32>
    %36 = arith.cmpi sge, %30, %35 : vector<8x80xi32>
    %cst_22 = arith.constant 0.000000e+00 : f32
    %37 = vector.broadcast %cst_22 : f32 to vector<8x80xf32>
    %38 = arith.select %36, %0, %37 : vector<8x80xi1>, vector<8x80xf32>
    %39 = vector.extract_strided_slice %28 {offsets = [0, 0], sizes = [8, 80], strides = [1, 1]} : vector<8x128xf32> to vector<8x80xf32>
    %cst_23 = arith.constant 5.000000e-01 : f32
    %40 = vector.broadcast %cst_23 : f32 to vector<8x80xf32>
    %41 = arith.mulf %40, %39 : vector<8x80xf32>
    %42 = math.exp %41 : vector<8x80xf32>
    %43 = arith.mulf %38, %42 : vector<8x80xf32>
    %44 = arith.truncf %34 : vector<8x128xf32> to vector<8x128xbf16>
    %c3 = arith.constant 3 : index
    %c0_24 = arith.constant 0 : index
    %c0_25 = arith.constant 0 : index
    %45 = vector.load %arg2[%c3, %c0_24, %c0_25] : memref<6x128x128xbf16, #tpu.memory_space<vmem>>, vector<1x128x128xbf16>
    %46 = vector.shape_cast %45 : vector<1x128x128xbf16> to vector<128x128xbf16>
    %cst_26 = arith.constant dense<0.000000e+00> : vector<8x128xf32>
    %47 = tpu.matmul %44, %46, %cst_26 {dimension_numbers = #tpu.dot_dimension_numbers<[1], [0], [0], [1], [0, 0, 1, 1], [], []>} : vector<8x128xbf16>, vector<128x128xbf16>, vector<8x128xf32> -> vector<8x128xf32>
    %48 = arith.truncf %43 : vector<8x80xf32> to vector<8x80xbf16>
    %c3_27 = arith.constant 3 : index
    %c0_28 = arith.constant 0 : index
    %c0_29 = arith.constant 0 : index
    %49 = vector.load %arg2[%c3_27, %c0_28, %c0_29] : memref<6x128x128xbf16, #tpu.memory_space<vmem>>, vector<1x80x128xbf16>
    %50 = vector.shape_cast %49 : vector<1x80x128xbf16> to vector<80x128xbf16>
    %cst_30 = arith.constant dense<0.000000e+00> : vector<8x128xf32>
    %51 = tpu.matmul %48, %50, %cst_30 {dimension_numbers = #tpu.dot_dimension_numbers<[1], [0], [0], [1], [0, 0, 1, 1], [], []>} : vector<8x80xbf16>, vector<80x128xbf16>, vector<8x128xf32> -> vector<8x128xf32>
    %52 = arith.addf %47, %51 : vector<8x128xf32>
    %c3_31 = arith.constant 3 : index
    %c0_32 = arith.constant 0 : index
    %c0_33 = arith.constant 0 : index
    %53 = vector.load %arg3[%c3_31, %c0_32, %c0_33] : memref<6x1x128xf32, #tpu.memory_space<vmem>>, vector<1x1x128xf32>
    %54 = vector.shape_cast %53 : vector<1x1x128xf32> to vector<1x128xf32>
    %55 = vector.broadcast %54 : vector<1x128xf32> to vector<8x128xf32>
    %56 = arith.addf %52, %55 : vector<8x128xf32>
    %cst_34 = arith.constant 0.000000e+00 : f32
    %57 = vector.broadcast %cst_34 : f32 to vector<8x128xf32>
    %58 = arith.maximumf %56, %57 : vector<8x128xf32>
    %59 = arith.truncf %58 : vector<8x128xf32> to vector<8x128xbf16>
    %c4 = arith.constant 4 : index
    %c0_35 = arith.constant 0 : index
    %c0_36 = arith.constant 0 : index
    %60 = vector.load %arg2[%c4, %c0_35, %c0_36] : memref<6x128x128xbf16, #tpu.memory_space<vmem>>, vector<1x128x128xbf16>
    %61 = vector.shape_cast %60 : vector<1x128x128xbf16> to vector<128x128xbf16>
    %cst_37 = arith.constant dense<0.000000e+00> : vector<8x128xf32>
    %62 = tpu.matmul %59, %61, %cst_37 {dimension_numbers = #tpu.dot_dimension_numbers<[1], [0], [0], [1], [0, 0, 1, 1], [], []>} : vector<8x128xbf16>, vector<128x128xbf16>, vector<8x128xf32> -> vector<8x128xf32>
    %c4_38 = arith.constant 4 : index
    %c0_39 = arith.constant 0 : index
    %c0_40 = arith.constant 0 : index
    %63 = vector.load %arg3[%c4_38, %c0_39, %c0_40] : memref<6x1x128xf32, #tpu.memory_space<vmem>>, vector<1x1x128xf32>
    %64 = vector.shape_cast %63 : vector<1x1x128xf32> to vector<1x128xf32>
    %65 = vector.broadcast %64 : vector<1x128xf32> to vector<8x128xf32>
    %66 = arith.addf %62, %65 : vector<8x128xf32>
    %cst_41 = arith.constant 0.000000e+00 : f32
    %67 = vector.broadcast %cst_41 : f32 to vector<8x128xf32>
    %68 = arith.maximumf %66, %67 : vector<8x128xf32>
    %69 = arith.truncf %68 : vector<8x128xf32> to vector<8x128xbf16>
    %c5 = arith.constant 5 : index
    %c0_42 = arith.constant 0 : index
    %c0_43 = arith.constant 0 : index
    %70 = vector.load %arg2[%c5, %c0_42, %c0_43] : memref<6x128x128xbf16, #tpu.memory_space<vmem>>, vector<1x128x128xbf16>
    %71 = vector.shape_cast %70 : vector<1x128x128xbf16> to vector<128x128xbf16>
    %cst_44 = arith.constant dense<0.000000e+00> : vector<8x128xf32>
    %72 = tpu.matmul %69, %71, %cst_44 {dimension_numbers = #tpu.dot_dimension_numbers<[1], [0], [0], [1], [0, 0, 1, 1], [], []>} : vector<8x128xbf16>, vector<128x128xbf16>, vector<8x128xf32> -> vector<8x128xf32>
    %c5_45 = arith.constant 5 : index
    %c0_46 = arith.constant 0 : index
    %c0_47 = arith.constant 0 : index
    %73 = vector.load %arg3[%c5_45, %c0_46, %c0_47] : memref<6x1x128xf32, #tpu.memory_space<vmem>>, vector<1x1x128xf32>
    %74 = vector.shape_cast %73 : vector<1x1x128xf32> to vector<1x128xf32>
    %75 = vector.broadcast %74 : vector<1x128xf32> to vector<8x128xf32>
    %76 = arith.addf %72, %75 : vector<8x128xf32>
    %c64_i32_48 = arith.constant 64 : i32
    %77 = vector.broadcast %c64_i32_48 : i32 to vector<8x128xi32>
    %78 = arith.cmpi slt, %29, %77 : vector<8x128xi32>
    %79 = arith.negf %76 : vector<8x128xf32>
    %80 = math.exp %79 : vector<8x128xf32>
    %cst_49 = arith.constant 1.000000e+00 : f32
    %81 = vector.broadcast %cst_49 : f32 to vector<8x128xf32>
    %82 = arith.addf %81, %80 : vector<8x128xf32>
    %83 = arith.divf %81, %82 : vector<8x128xf32>
    %84 = arith.select %78, %83, %28 : vector<8x128xi1>, vector<8x128xf32>
    %c0_50 = arith.constant 0 : index
    %c0_51 = arith.constant 0 : index
    %85 = vector.load %arg4[%c0_50, %c0_51] : memref<8x128xf32, #tpu.memory_space<vmem>>, vector<8x128xf32>
    tpu.vector_store %arg4[%c0_50, %c0_51], %84 {strides = array<i32>} : memref<8x128xf32, #tpu.memory_space<vmem>>, vector<8x128xf32>,
    return
  }
  func.func @transform_0(%arg0: i32) -> (i32, i32) {
    %c0_i32 = arith.constant 0 : i32
    %c0_i32_0 = arith.constant 0 : i32
    return %arg0, %c0_i32 : i32, i32
  }
  func.func @transform_1(%arg0: i32) -> (i32, i32, i32) {
    %c0_i32 = arith.constant 0 : i32
    %c0_i32_0 = arith.constant 0 : i32
    %c0_i32_1 = arith.constant 0 : i32
    %c0_i32_2 = arith.constant 0 : i32
    return %c0_i32, %c0_i32_0, %c0_i32_1 : i32, i32, i32
  }
  func.func @transform_2(%arg0: i32) -> (i32, i32, i32) {
    %c0_i32 = arith.constant 0 : i32
    %c0_i32_0 = arith.constant 0 : i32
    %c0_i32_1 = arith.constant 0 : i32
    %c0_i32_2 = arith.constant 0 : i32
    return %c0_i32, %c0_i32_0, %c0_i32_1 : i32, i32, i32
  }
  func.func @transform_3(%arg0: i32) -> (i32, i32) {
    %c0_i32 = arith.constant 0 : i32
    %c0_i32_0 = arith.constant 0 : i32
    return %arg0, %c0_i32 : i32, i32
  }
}

</mosaic_0001>

<llo_original>
// kernel: vae_forward.1
$region0: #{vae_forward.1}
  #allocation0 [shape = 'u32[]', space=smem, size = 0x4, offset = 0x4, fixed_abs, tag = 'smem constant byte address 0x4 - core index']
  #allocation1 [shape = 'u32[144,128]{1,0:T(1,128)}', space=vmem, size = 0x12000, scoped, tag = 'internal scratch']
  %s0 = inlined_call_operand.vmem [shape: f32[8,80], index: 0, kind: input, shape index: {}]
  %s1 = inlined_call_operand.hbm [shape: bf16[6,128,128], index: 1, kind: input, shape index: {}]
  %s2 = inlined_call_operand.vmem [shape: f32[6,1,128], index: 2, kind: input, shape index: {}]
  %s3 = inlined_call_operand.vmem [shape: f32[8,128], index: 3, kind: output, shape index: {}]
  %s4 = sld [smem:[#allocation0]]
  $region26: #{vae_forward.1} parent=0
    _
  %s6 = ssub.s32 1, %s4
  %s7 = scalar_select 0, %s6, %s4
  $region1: #{vae_forward.1} parent=0
    #allocation2 [shape = 'u8[196608]{0}', space=vmem, size = 0x30000, scoped, tag = 'input window, operand 1, single buffered']
    #allocation3 [shape = 's32[1]{0}', space=sflag, size = 0x4, scoped, tag = 'scoped memory for vae_forward.1']
    %8 = vsyncpa [#allocation3], 0
    // Predicated region
    $region2: #{vae_forward.1} parent=1 // pred_check
      _
    $region3: #{vae_forward.1} parent=1 // pred_check_branch
      %10 = sbr.rel (0) target = $region5
    $region4: #{vae_forward.1} parent=1 // pred_region
      _
    $region5: #{vae_forward.1} parent=1 // pred_fallthru
      _
    // Predicated region
    $region6: #{vae_forward.1} parent=1 // pred_check
      _
    $region7: #{vae_forward.1} parent=1 // pred_check_branch
      %12 = sbr.rel (0) target = $region9
    $region8: #{vae_forward.1} parent=1 // pred_region
      %s14 = ssub.s32 6144, 6144
      %15 = vsyncadd [#allocation3], %s14
      %s16 = sshll.u32 [#allocation2], 4
      %s17 = int_to_ptr.vmem [resolvable:$true] %s16
      %22 = dma.hbm_to_vmem [thread:$0]  %s1, 6144, %s17, [#allocation3], 64, 64, 4
    $region9: #{vae_forward.1} parent=1 // pred_fallthru
      _
    // Predicated region
    $region10: #{vae_forward.1} parent=1 // pred_check
      _
    $region11: #{vae_forward.1} parent=1 // pred_check_branch
      %24 = sbr.rel (0) target = $region13
    $region12: #{vae_forward.1} parent=1 // pred_region
      _
    $region13: #{vae_forward.1} parent=1 // pred_fallthru
      _
    // Predicated region
    $region14: #{vae_forward.1} parent=1 // pred_check
      _
    $region15: #{vae_forward.1} parent=1 // pred_check_branch
      %26 = sbr.rel (0) target = $region17
    $region16: #{vae_forward.1} parent=1 // pred_region
      %27 = dma.done [#allocation3], 6144
    $region17: #{vae_forward.1} parent=1 // pred_fallthru
      _
    %v29 = vld [vmem:[%s0] sm:$0xff]
    %v30 = vpack.c.bf16 %v29, %v29
    %v31 = vld [vmem:[#allocation2] sm:$0xf]
    %v32 = vld [vmem:[#allocation2 + $0x4] sm:$0xf]
    %v33 = vld [vmem:[#allocation2 + $0x8] sm:$0xf]
    %v34 = vld [vmem:[#allocation2 + $0xc] sm:$0xf]
    %v35 = vld [vmem:[#allocation2 + $0x10] sm:$0xf]
    %v36 = vld [vmem:[#allocation2 + $0x14] sm:$0xf]
    %v37 = vld [vmem:[#allocation2 + $0x18] sm:$0xf]
    %v38 = vld [vmem:[#allocation2 + $0x1c] sm:$0xf]
    %v39 = vld [vmem:[#allocation2 + $0x20] sm:$0xf]
    %v40 = vld [vmem:[#allocation2 + $0x24] sm:$0xf]
    %v41 = vld [vmem:[%s2] sm:$0x1]
    %v43 = vlaneseq
    %v44 = vshrl.u32 %v43, 7
    %v45 = vsub.s32 0, %v44
    %v46 = vrot.slane %v41, %v45
    %v58 = vunpack.c.l.b16 %v31
    %v59 = vunpack.c.l.b16 %v32
    %v60 = vunpack.c.l.b16 %v33
    %v61 = vunpack.c.l.b16 %v34
    %v62 = vunpack.c.l.b16 %v35
    %v63 = vunpack.c.l.b16 %v36
    %v64 = vunpack.c.l.b16 %v37
    %v65 = vunpack.c.l.b16 %v38
    %v66 = vunpack.c.l.b16 %v39
    %v67 = vunpack.c.l.b16 %v40
    %v68 = vpack.c.b16 %v59, %v58
    %v69 = vpack.c.b16 %v61, %v60
    %v70 = vpack.c.b16 %v63, %v62
    %v71 = vpack.c.b16 %v65, %v64
    %v72 = vpack.c.b16 %v67, %v66
    %vm78 = vcmask 654336
    %v80 = vsel %vm78, %v30, 0
    %82 = vmatprep.subr.bf16.mxu0 0
    %83 = vmatpush1.bf16.msra.mxu0 0
    %84 = vmatprep.subr.bf16.mxu0 0
    %85 = vmatpush1.bf16.msra.mxu0 0
    %86 = vmatprep.subr.bf16.mxu0 0
    %87 = vmatpush1.bf16.msra.mxu0 0
    %88 = vmatprep.subr.bf16.mxu0 0
    %89 = vmatpush1.bf16.msra.mxu0 %v72
    %90 = vmatprep.subr.bf16.mxu0 0
    %91 = vmatpush1.bf16.msra.mxu0 %v71
    %92 = vmatprep.subr.bf16.mxu0 0
    %93 = vmatpush1.bf16.msra.mxu0 %v70
    %94 = vmatprep.subr.bf16.mxu0 0
    %95 = vmatpush1.bf16.msra.mxu0 %v69
    %96 = vmatprep.subr.bf16.mxu0 0
    %97 = vmatpush1.bf16.msra.mxu0 %v68
    %98 = vmatprep.subr.bf16.mxu0 0
    %99 = vmatpush2.bf16.msra.mxu0 0
    %100 = vmatprep.subr.bf16.mxu0 0
    %101 = vmatpush2.bf16.msra.mxu0 0
    %102 = vmatprep.subr.bf16.mxu0 0
    %103 = vmatpush2.bf16.msra.mxu0 0
    %104 = vmatprep.subr.bf16.mxu0 0
    %105 = vmatpush2.bf16.msra.mxu0 0
    %106 = vmatprep.subr.bf16.mxu0 0
    %107 = vmatpush2.bf16.msra.mxu0 0
    %108 = vmatprep.subr.bf16.mxu0 0
    %109 = vmatpush2.bf16.msra.mxu0 0
    %110 = vmatprep.subr.bf16.mxu0 0
    %111 = vmatpush2.bf16.msra.mxu0 0
    %112 = vmatprep.subr.bf16.mxu0 0
    %113 = vmatpush2.bf16.msra.mxu0 0
    %114 = vmatprep.mubr.bf16.mxu0 0
    %115 = vmatmul.mubr.bf16.gmra.mxu0 %v80
    %v116 = vpop.f32.mrf.mxu0
    %v117 = vadd.f32 %v46, %v116
    %v118 = vpop.f32.mrf.mxu0
    %v119 = vpop.f32.mrf.mxu0
    %v120 = vpop.f32.mrf.mxu0
    %121 = vdwg.mxu0
    %v122 = vmax.f32 %v117, 0.0
    %v123 = vpack.c.bf16 %v122, %v122
    %s124 = scalar_lea.vmem [#allocation2], 64
    %v125 = vld [vmem:[%s124] sm:$0xf]
    %v126 = vld [vmem:[%s124 + $0x4] sm:$0xf]
    %v127 = vld [vmem:[%s124 + $0x8] sm:$0xf]
    %v128 = vld [vmem:[%s124 + $0xc] sm:$0xf]
    %v129 = vld [vmem:[%s124 + $0x10] sm:$0xf]
    %v130 = vld [vmem:[%s124 + $0x14] sm:$0xf]
    %v131 = vld [vmem:[%s124 + $0x18] sm:$0xf]
    %v132 = vld [vmem:[%s124 + $0x1c] sm:$0xf]
    %v133 = vld [vmem:[%s124 + $0x20] sm:$0xf]
    %v134 = vld [vmem:[%s124 + $0x24] sm:$0xf]
    %v135 = vld [vmem:[%s124 + $0x28] sm:$0xf]
    %v136 = vld [vmem:[%s124 + $0x2c] sm:$0xf]
    %v137 = vld [vmem:[%s124 + $0x30] sm:$0xf]
    %v138 = vld [vmem:[%s124 + $0x34] sm:$0xf]
    %v139 = vld [vmem:[%s124 + $0x38] sm:$0xf]
    %v140 = vld [vmem:[%s124 + $0x3c] sm:$0xf]
    %s141 = scalar_lea.vmem %s2, 1
    %v142 = vld [vmem:[%s141] sm:$0x1]
    %v144 = vlaneseq
    %v145 = vshrl.u32 %v144, 7
    %v146 = vsub.s32 0, %v145
    %v147 = vrot.slane %v142, %v146
    %v165 = vunpack.c.l.b16 %v125
    %v166 = vunpack.c.l.b16 %v126
    %v167 = vunpack.c.l.b16 %v127
    %v168 = vunpack.c.l.b16 %v128
    %v169 = vunpack.c.l.b16 %v129
    %v170 = vunpack.c.l.b16 %v130
    %v171 = vunpack.c.l.b16 %v131
    %v172 = vunpack.c.l.b16 %v132
    %v173 = vunpack.c.l.b16 %v133
    %v174 = vunpack.c.l.b16 %v134
    %v175 = vunpack.c.l.b16 %v135
    %v176 = vunpack.c.l.b16 %v136
    %v177 = vunpack.c.l.b16 %v137
    %v178 = vunpack.c.l.b16 %v138
    %v179 = vunpack.c.l.b16 %v139
    %v180 = vunpack.c.l.b16 %v140
    %v181 = vpack.c.b16 %v166, %v165
    %v182 = vpack.c.b16 %v168, %v167
    %v183 = vpack.c.b16 %v170, %v169
    %v184 = vpack.c.b16 %v172, %v171
    %v185 = vpack.c.b16 %v174, %v173
    %v186 = vpack.c.b16 %v176, %v175
    %v187 = vpack.c.b16 %v178, %v177
    %v188 = vpack.c.b16 %v180, %v179
    %197 = vmatprep.subr.bf16.mxu0 0
    %198 = vmatpush1.bf16.msra.mxu0 %v188
    %199 = vmatprep.subr.bf16.mxu0 0
    %200 = vmatpush1.bf16.msra.mxu0 %v187
    %201 = vmatprep.subr.bf16.mxu0 0
    %202 = vmatpush1.bf16.msra.mxu0 %v186
    %203 = vmatprep.subr.bf16.mxu0 0
    %204 = vmatpush1.bf16.msra.mxu0 %v185
    %205 = vmatprep.subr.bf16.mxu0 0
    %206 = vmatpush1.bf16.msra.mxu0 %v184
    %207 = vmatprep.subr.bf16.mxu0 0
    %208 = vmatpush1.bf16.msra.mxu0 %v183
    %209 = vmatprep.subr.bf16.mxu0 0
    %210 = vmatpush1.bf16.msra.mxu0 %v182
    %211 = vmatprep.subr.bf16.mxu0 0
    %212 = vmatpush1.bf16.msra.mxu0 %v181
    %213 = vmatprep.subr.bf16.mxu0 0
    %214 = vmatpush2.bf16.msra.mxu0 0
    %215 = vmatprep.subr.bf16.mxu0 0
    %216 = vmatpush2.bf16.msra.mxu0 0
    %217 = vmatprep.subr.bf16.mxu0 0
    %218 = vmatpush2.bf16.msra.mxu0 0
    %219 = vmatprep.subr.bf16.mxu0 0
    %220 = vmatpush2.bf16.msra.mxu0 0
    %221 = vmatprep.subr.bf16.mxu0 0
    %222 = vmatpush2.bf16.msra.mxu0 0
    %223 = vmatprep.subr.bf16.mxu0 0
    %224 = vmatpush2.bf16.msra.mxu0 0
    %225 = vmatprep.subr.bf16.mxu0 0
    %226 = vmatpush2.bf16.msra.mxu0 0
    %227 = vmatprep.subr.bf16.mxu0 0
    %228 = vmatpush2.bf16.msra.mxu0 0
    %229 = vmatprep.mubr.bf16.mxu0 0
    %230 = vmatmul.mubr.bf16.gmra.mxu0 %v123
    %v231 = vpop.f32.mrf.mxu0
    %v232 = vadd.f32 %v147, %v231
    %v233 = vpop.f32.mrf.mxu0
    %v234 = vpop.f32.mrf.mxu0
    %v235 = vpop.f32.mrf.mxu0
    %236 = vdwg.mxu0
    %v237 = vmax.f32 %v232, 0.0
    %v238 = vpack.c.bf16 %v237, %v237
    %s239 = scalar_lea.vmem [#allocation2], 128
    %v240 = vld [vmem:[%s239] sm:$0xf]
    %v241 = vld [vmem:[%s239 + $0x4] sm:$0xf]
    %v242 = vld [vmem:[%s239 + $0x8] sm:$0xf]
    %v243 = vld [vmem:[%s239 + $0xc] sm:$0xf]
    %v244 = vld [vmem:[%s239 + $0x10] sm:$0xf]
    %v245 = vld [vmem:[%s239 + $0x14] sm:$0xf]
    %v246 = vld [vmem:[%s239 + $0x18] sm:$0xf]
    %v247 = vld [vmem:[%s239 + $0x1c] sm:$0xf]
    %v248 = vld [vmem:[%s239 + $0x20] sm:$0xf]
    %v249 = vld [vmem:[%s239 + $0x24] sm:$0xf]
    %v250 = vld [vmem:[%s239 + $0x28] sm:$0xf]
    %v251 = vld [vmem:[%s239 + $0x2c] sm:$0xf]
    %v252 = vld [vmem:[%s239 + $0x30] sm:$0xf]
    %v253 = vld [vmem:[%s239 + $0x34] sm:$0xf]
    %v254 = vld [vmem:[%s239 + $0x38] sm:$0xf]
    %v255 = vld [vmem:[%s239 + $0x3c] sm:$0xf]
    %s256 = scalar_lea.vmem %s2, 2
    %v257 = vld [vmem:[%s256] sm:$0x1]
    %v259 = vlaneseq
    %v260 = vshrl.u32 %v259, 7
    %v261 = vsub.s32 0, %v260
    %v262 = vrot.slane %v257, %v261
    %v280 = vunpack.c.l.b16 %v240
    %v281 = vunpack.c.l.b16 %v241
    %v282 = vunpack.c.l.b16 %v242
    %v283 = vunpack.c.l.b16 %v243
    %v284 = vunpack.c.l.b16 %v244
    %v285 = vunpack.c.l.b16 %v245
    %v286 = vunpack.c.l.b16 %v246
    %v287 = vunpack.c.l.b16 %v247
    %v288 = vunpack.c.l.b16 %v248
    %v289 = vunpack.c.l.b16 %v249
    %v290 = vunpack.c.l.b16 %v250
    %v291 = vunpack.c.l.b16 %v251
    %v292 = vunpack.c.l.b16 %v252
    %v293 = vunpack.c.l.b16 %v253
    %v294 = vunpack.c.l.b16 %v254
    %v295 = vunpack.c.l.b16 %v255
    %v296 = vpack.c.b16 %v281, %v280
    %v297 = vpack.c.b16 %v283, %v282
    %v298 = vpack.c.b16 %v285, %v284
    %v299 = vpack.c.b16 %v287, %v286
    %v300 = vpack.c.b16 %v289, %v288
    %v301 = vpack.c.b16 %v291, %v290
    %v302 = vpack.c.b16 %v293, %v292
    %v303 = vpack.c.b16 %v295, %v294
    %312 = vmatprep.subr.bf16.mxu0 0
    %313 = vmatpush1.bf16.msra.mxu0 %v303
    %314 = vmatprep.subr.bf16.mxu0 0
    %315 = vmatpush1.bf16.msra.mxu0 %v302
    %316 = vmatprep.subr.bf16.mxu0 0
    %317 = vmatpush1.bf16.msra.mxu0 %v301
    %318 = vmatprep.subr.bf16.mxu0 0
    %319 = vmatpush1.bf16.msra.mxu0 %v300
    %320 = vmatprep.subr.bf16.mxu0 0
    %321 = vmatpush1.bf16.msra.mxu0 %v299
    %322 = vmatprep.subr.bf16.mxu0 0
    %323 = vmatpush1.bf16.msra.mxu0 %v298
    %324 = vmatprep.subr.bf16.mxu0 0
    %325 = vmatpush1.bf16.msra.mxu0 %v297
    %326 = vmatprep.subr.bf16.mxu0 0
    %327 = vmatpush1.bf16.msra.mxu0 %v296
    %328 = vmatprep.subr.bf16.mxu0 0
    %329 = vmatpush2.bf16.msra.mxu0 0
    %330 = vmatprep.subr.bf16.mxu0 0
    %331 = vmatpush2.bf16.msra.mxu0 0
    %332 = vmatprep.subr.bf16.mxu0 0
    %333 = vmatpush2.bf16.msra.mxu0 0
    %334 = vmatprep.subr.bf16.mxu0 0
    %335 = vmatpush2.bf16.msra.mxu0 0
    %336 = vmatprep.subr.bf16.mxu0 0
    %337 = vmatpush2.bf16.msra.mxu0 0
    %338 = vmatprep.subr.bf16.mxu0 0
    %339 = vmatpush2.bf16.msra.mxu0 0
    %340 = vmatprep.subr.bf16.mxu0 0
    %341 = vmatpush2.bf16.msra.mxu0 0
    %342 = vmatprep.subr.bf16.mxu0 0
    %343 = vmatpush2.bf16.msra.mxu0 0
    %344 = vmatprep.mubr.bf16.mxu0 0
    %345 = vmatmul.mubr.bf16.gmra.mxu0 %v238
    %v346 = vpop.f32.mrf.mxu0
    %v347 = vadd.f32 %v262, %v346
    %v348 = vpop.f32.mrf.mxu0
    %v349 = vpop.f32.mrf.mxu0
    %v350 = vpop.f32.mrf.mxu0
    %351 = vdwg.mxu0
    %v352 = vlaneseq
    %v353 = vand.u32 %v352, 127
    %vm354 = vcmp.ge.s32.totalorder %v353, 80
    %v355 = vsel %vm354, %v347, 0.0
    %vm356 = vcmp.ge.s32.totalorder %v353, 64
    %v357 = vsel %vm356, %v29, 0.0
    %v358 = vmul.f32 %v347, 0.5
    %v359 = vmul.f32 %v358, 1.442695
    %v360 = vpow.pop %v359
    %v361 = vmul.f32 %v357, %v360
    %v362 = vpack.c.bf16 %v355, %v355
    %s363 = scalar_lea.vmem [#allocation2], 192
    %v364 = vld [vmem:[%s363] sm:$0xf]
    %v365 = vld [vmem:[%s363 + $0x4] sm:$0xf]
    %v366 = vld [vmem:[%s363 + $0x8] sm:$0xf]
    %v367 = vld [vmem:[%s363 + $0xc] sm:$0xf]
    %v368 = vld [vmem:[%s363 + $0x10] sm:$0xf]
    %v369 = vld [vmem:[%s363 + $0x14] sm:$0xf]
    %v370 = vld [vmem:[%s363 + $0x18] sm:$0xf]
    %v371 = vld [vmem:[%s363 + $0x1c] sm:$0xf]
    %v372 = vld [vmem:[%s363 + $0x20] sm:$0xf]
    %v373 = vld [vmem:[%s363 + $0x24] sm:$0xf]
    %v374 = vld [vmem:[%s363 + $0x28] sm:$0xf]
    %v375 = vld [vmem:[%s363 + $0x2c] sm:$0xf]
    %v376 = vld [vmem:[%s363 + $0x30] sm:$0xf]
    %v377 = vld [vmem:[%s363 + $0x34] sm:$0xf]
    %v378 = vld [vmem:[%s363 + $0x38] sm:$0xf]
    %v379 = vld [vmem:[%s363 + $0x3c] sm:$0xf]
    %v380 = vpack.c.bf16 %v361, %v361
    %v391 = vunpack.c.l.b16 %v364
    %v392 = vunpack.c.l.b16 %v365
    %v393 = vunpack.c.l.b16 %v366
    %v394 = vunpack.c.l.b16 %v367
    %v395 = vunpack.c.l.b16 %v368
    %v396 = vunpack.c.l.b16 %v369
    %v397 = vunpack.c.l.b16 %v370
    %v398 = vunpack.c.l.b16 %v371
    %v399 = vunpack.c.l.b16 %v372
    %v400 = vunpack.c.l.b16 %v373
    %v401 = vpack.c.b16 %v392, %v391
    %v402 = vpack.c.b16 %v394, %v393
    %v403 = vpack.c.b16 %v396, %v395
    %v404 = vpack.c.b16 %v398, %v397
    %v405 = vpack.c.b16 %v400, %v399
    %v412 = vsel %vm78, %v380, 0
    %414 = vmatprep.subr.bf16.mxu0 0
    %415 = vmatpush1.bf16.msra.mxu0 0
    %416 = vmatprep.subr.bf16.mxu0 0
    %417 = vmatpush1.bf16.msra.mxu0 0
    %418 = vmatprep.subr.bf16.mxu0 0
    %419 = vmatpush1.bf16.msra.mxu0 0
    %420 = vmatprep.subr.bf16.mxu0 0
    %421 = vmatpush1.bf16.msra.mxu0 %v405
    %422 = vmatprep.subr.bf16.mxu0 0
    %423 = vmatpush1.bf16.msra.mxu0 %v404
    %424 = vmatprep.subr.bf16.mxu0 0
    %425 = vmatpush1.bf16.msra.mxu0 %v403
    %426 = vmatprep.subr.bf16.mxu0 0
    %427 = vmatpush1.bf16.msra.mxu0 %v402
    %428 = vmatprep.subr.bf16.mxu0 0
    %429 = vmatpush1.bf16.msra.mxu0 %v401
    %430 = vmatprep.subr.bf16.mxu0 0
    %431 = vmatpush2.bf16.msra.mxu0 0
    %432 = vmatprep.subr.bf16.mxu0 0
    %433 = vmatpush2.bf16.msra.mxu0 0
    %434 = vmatprep.subr.bf16.mxu0 0
    %435 = vmatpush2.bf16.msra.mxu0 0
    %436 = vmatprep.subr.bf16.mxu0 0
    %437 = vmatpush2.bf16.msra.mxu0 0
    %438 = vmatprep.subr.bf16.mxu0 0
    %439 = vmatpush2.bf16.msra.mxu0 0
    %440 = vmatprep.subr.bf16.mxu0 0
    %441 = vmatpush2.bf16.msra.mxu0 0
    %442 = vmatprep.subr.bf16.mxu0 0
    %443 = vmatpush2.bf16.msra.mxu0 0
    %444 = vmatprep.subr.bf16.mxu0 0
    %445 = vmatpush2.bf16.msra.mxu0 0
    %446 = vmatprep.mubr.bf16.mxu0 0
    %447 = vmatmul.mubr.bf16.gmra.mxu0 %v412
    %v448 = vpop.f32.mrf.mxu0
    %v449 = vadd.f32 0.0, %v448
    %v450 = vpop.f32.mrf.mxu0
    %v451 = vpop.f32.mrf.mxu0
    %v452 = vpop.f32.mrf.mxu0
    %453 = vdwg.mxu0
    %v460 = vunpack.c.l.b16 %v374
    %v461 = vunpack.c.l.b16 %v375
    %v462 = vunpack.c.l.b16 %v376
    %v463 = vunpack.c.l.b16 %v377
    %v464 = vunpack.c.l.b16 %v378
    %v465 = vunpack.c.l.b16 %v379
    %v466 = vpack.c.b16 %v461, %v460
    %v467 = vpack.c.b16 %v463, %v462
    %v468 = vpack.c.b16 %v465, %v464
    %472 = vmatprep.subr.bf16.mxu0 0
    %473 = vmatpush1.bf16.msra.mxu0 %v468
    %474 = vmatprep.subr.bf16.mxu0 0
    %475 = vmatpush1.bf16.msra.mxu0 %v467
    %476 = vmatprep.subr.bf16.mxu0 0
    %477 = vmatpush1.bf16.msra.mxu0 %v466
    %478 = vmatprep.subr.bf16.mxu0 0
    %479 = vmatpush1.bf16.msra.mxu0 %v405
    %480 = vmatprep.subr.bf16.mxu0 0
    %481 = vmatpush1.bf16.msra.mxu0 %v404
    %482 = vmatprep.subr.bf16.mxu0 0
    %483 = vmatpush1.bf16.msra.mxu0 %v403
    %484 = vmatprep.subr.bf16.mxu0 0
    %485 = vmatpush1.bf16.msra.mxu0 %v402
    %486 = vmatprep.subr.bf16.mxu0 0
    %487 = vmatpush1.bf16.msra.mxu0 %v401
    %488 = vmatprep.subr.bf16.mxu0 0
    %489 = vmatpush2.bf16.msra.mxu0 0
    %490 = vmatprep.subr.bf16.mxu0 0
    %491 = vmatpush2.bf16.msra.mxu0 0
    %492 = vmatprep.subr.bf16.mxu0 0
    %493 = vmatpush2.bf16.msra.mxu0 0
    %494 = vmatprep.subr.bf16.mxu0 0
    %495 = vmatpush2.bf16.msra.mxu0 0
    %496 = vmatprep.subr.bf16.mxu0 0
    %497 = vmatpush2.bf16.msra.mxu0 0
    %498 = vmatprep.subr.bf16.mxu0 0
    %499 = vmatpush2.bf16.msra.mxu0 0
    %500 = vmatprep.subr.bf16.mxu0 0
    %501 = vmatpush2.bf16.msra.mxu0 0
    %502 = vmatprep.subr.bf16.mxu0 0
    %503 = vmatpush2.bf16.msra.mxu0 0
    %504 = vmatprep.mubr.bf16.mxu0 0
    %505 = vmatmul.mubr.bf16.gmra.mxu0 %v362
    %v506 = vpop.f32.mrf.mxu0
    %v507 = vadd.f32 %v449, %v506
    %v508 = vpop.f32.mrf.mxu0
    %v509 = vpop.f32.mrf.mxu0
    %v510 = vpop.f32.mrf.mxu0
    %511 = vdwg.mxu0
    %s512 = scalar_lea.vmem %s2, 3
    %v513 = vld [vmem:[%s512] sm:$0x1]
    %v515 = vlaneseq
    %v516 = vshrl.u32 %v515, 7
    %v517 = vsub.s32 0, %v516
    %v518 = vrot.slane %v513, %v517
    %v520 = vadd.f32 %v507, %v518
    %v521 = vmax.f32 %v520, 0.0
    %v522 = vpack.c.bf16 %v521, %v521
    %s523 = scalar_lea.vmem [#allocation2], 256
    %v524 = vld [vmem:[%s523] sm:$0xf]
    %v525 = vld [vmem:[%s523 + $0x4] sm:$0xf]
    %v526 = vld [vmem:[%s523 + $0x8] sm:$0xf]
    %v527 = vld [vmem:[%s523 + $0xc] sm:$0xf]
    %v528 = vld [vmem:[%s523 + $0x10] sm:$0xf]
    %v529 = vld [vmem:[%s523 + $0x14] sm:$0xf]
    %v530 = vld [vmem:[%s523 + $0x18] sm:$0xf]
    %v531 = vld [vmem:[%s523 + $0x1c] sm:$0xf]
    %v532 = vld [vmem:[%s523 + $0x20] sm:$0xf]
    %v533 = vld [vmem:[%s523 + $0x24] sm:$0xf]
    %v534 = vld [vmem:[%s523 + $0x28] sm:$0xf]
    %v535 = vld [vmem:[%s523 + $0x2c] sm:$0xf]
    %v536 = vld [vmem:[%s523 + $0x30] sm:$0xf]
    %v537 = vld [vmem:[%s523 + $0x34] sm:$0xf]
    %v538 = vld [vmem:[%s523 + $0x38] sm:$0xf]
    %v539 = vld [vmem:[%s523 + $0x3c] sm:$0xf]
    %s540 = scalar_lea.vmem %s2, 4
    %v541 = vld [vmem:[%s540] sm:$0x1]
    %v543 = vlaneseq
    %v544 = vshrl.u32 %v543, 7
    %v545 = vsub.s32 0, %v544
    %v546 = vrot.slane %v541, %v545
    %v564 = vunpack.c.l.b16 %v524
    %v565 = vunpack.c.l.b16 %v525
    %v566 = vunpack.c.l.b16 %v526
    %v567 = vunpack.c.l.b16 %v527
    %v568 = vunpack.c.l.b16 %v528
    %v569 = vunpack.c.l.b16 %v529
    %v570 = vunpack.c.l.b16 %v530
    %v571 = vunpack.c.l.b16 %v531
    %v572 = vunpack.c.l.b16 %v532
    %v573 = vunpack.c.l.b16 %v533
    %v574 = vunpack.c.l.b16 %v534
    %v575 = vunpack.c.l.b16 %v535
    %v576 = vunpack.c.l.b16 %v536
    %v577 = vunpack.c.l.b16 %v537
    %v578 = vunpack.c.l.b16 %v538
    %v579 = vunpack.c.l.b16 %v539
    %v580 = vpack.c.b16 %v565, %v564
    %v581 = vpack.c.b16 %v567, %v566
    %v582 = vpack.c.b16 %v569, %v568
    %v583 = vpack.c.b16 %v571, %v570
    %v584 = vpack.c.b16 %v573, %v572
    %v585 = vpack.c.b16 %v575, %v574
    %v586 = vpack.c.b16 %v577, %v576
    %v587 = vpack.c.b16 %v579, %v578
    %596 = vmatprep.subr.bf16.mxu0 0
    %597 = vmatpush1.bf16.msra.mxu0 %v587
    %598 = vmatprep.subr.bf16.mxu0 0
    %599 = vmatpush1.bf16.msra.mxu0 %v586
    %600 = vmatprep.subr.bf16.mxu0 0
    %601 = vmatpush1.bf16.msra.mxu0 %v585
    %602 = vmatprep.subr.bf16.mxu0 0
    %603 = vmatpush1.bf16.msra.mxu0 %v584
    %604 = vmatprep.subr.bf16.mxu0 0
    %605 = vmatpush1.bf16.msra.mxu0 %v583
    %606 = vmatprep.subr.bf16.mxu0 0
    %607 = vmatpush1.bf16.msra.mxu0 %v582
    %608 = vmatprep.subr.bf16.mxu0 0
    %609 = vmatpush1.bf16.msra.mxu0 %v581
    %610 = vmatprep.subr.bf16.mxu0 0
    %611 = vmatpush1.bf16.msra.mxu0 %v580
    %612 = vmatprep.subr.bf16.mxu0 0
    %613 = vmatpush2.bf16.msra.mxu0 0
    %614 = vmatprep.subr.bf16.mxu0 0
    %615 = vmatpush2.bf16.msra.mxu0 0
    %616 = vmatprep.subr.bf16.mxu0 0
    %617 = vmatpush2.bf16.msra.mxu0 0
    %618 = vmatprep.subr.bf16.mxu0 0
    %619 = vmatpush2.bf16.msra.mxu0 0
    %620 = vmatprep.subr.bf16.mxu0 0
    %621 = vmatpush2.bf16.msra.mxu0 0
    %622 = vmatprep.subr.bf16.mxu0 0
    %623 = vmatpush2.bf16.msra.mxu0 0
    %624 = vmatprep.subr.bf16.mxu0 0
    %625 = vmatpush2.bf16.msra.mxu0 0
    %626 = vmatprep.subr.bf16.mxu0 0
    %627 = vmatpush2.bf16.msra.mxu0 0
    %628 = vmatprep.mubr.bf16.mxu0 0
    %629 = vmatmul.mubr.bf16.gmra.mxu0 %v522
    %v630 = vpop.f32.mrf.mxu0
    %v631 = vadd.f32 %v546, %v630
    %v632 = vpop.f32.mrf.mxu0
    %v633 = vpop.f32.mrf.mxu0
    %v634 = vpop.f32.mrf.mxu0
    %635 = vdwg.mxu0
    %v636 = vmax.f32 %v631, 0.0
    %v637 = vpack.c.bf16 %v636, %v636
    %s638 = scalar_lea.vmem [#allocation2], 320
    %v639 = vld [vmem:[%s638] sm:$0xf]
    %v640 = vld [vmem:[%s638 + $0x4] sm:$0xf]
    %v641 = vld [vmem:[%s638 + $0x8] sm:$0xf]
    %v642 = vld [vmem:[%s638 + $0xc] sm:$0xf]
    %v643 = vld [vmem:[%s638 + $0x10] sm:$0xf]
    %v644 = vld [vmem:[%s638 + $0x14] sm:$0xf]
    %v645 = vld [vmem:[%s638 + $0x18] sm:$0xf]
    %v646 = vld [vmem:[%s638 + $0x1c] sm:$0xf]
    %v647 = vld [vmem:[%s638 + $0x20] sm:$0xf]
    %v648 = vld [vmem:[%s638 + $0x24] sm:$0xf]
    %v649 = vld [vmem:[%s638 + $0x28] sm:$0xf]
    %v650 = vld [vmem:[%s638 + $0x2c] sm:$0xf]
    %v651 = vld [vmem:[%s638 + $0x30] sm:$0xf]
    %v652 = vld [vmem:[%s638 + $0x34] sm:$0xf]
    %v653 = vld [vmem:[%s638 + $0x38] sm:$0xf]
    %v654 = vld [vmem:[%s638 + $0x3c] sm:$0xf]
    %s655 = scalar_lea.vmem %s2, 5
    %v656 = vld [vmem:[%s655] sm:$0x1]
    %v658 = vlaneseq
    %v659 = vshrl.u32 %v658, 7
    %v660 = vsub.s32 0, %v659
    %v661 = vrot.slane %v656, %v660
    %v679 = vunpack.c.l.b16 %v639
    %v680 = vunpack.c.l.b16 %v640
    %v681 = vunpack.c.l.b16 %v641
    %v682 = vunpack.c.l.b16 %v642
    %v683 = vunpack.c.l.b16 %v643
    %v684 = vunpack.c.l.b16 %v644
    %v685 = vunpack.c.l.b16 %v645
    %v686 = vunpack.c.l.b16 %v646
    %v687 = vunpack.c.l.b16 %v647
    %v688 = vunpack.c.l.b16 %v648
    %v689 = vunpack.c.l.b16 %v649
    %v690 = vunpack.c.l.b16 %v650
    %v691 = vunpack.c.l.b16 %v651
    %v692 = vunpack.c.l.b16 %v652
    %v693 = vunpack.c.l.b16 %v653
    %v694 = vunpack.c.l.b16 %v654
    %v695 = vpack.c.b16 %v680, %v679
    %v696 = vpack.c.b16 %v682, %v681
    %v697 = vpack.c.b16 %v684, %v683
    %v698 = vpack.c.b16 %v686, %v685
    %v699 = vpack.c.b16 %v688, %v687
    %v700 = vpack.c.b16 %v690, %v689
    %v701 = vpack.c.b16 %v692, %v691
    %v702 = vpack.c.b16 %v694, %v693
    %711 = vmatprep.subr.bf16.mxu0 0
    %712 = vmatpush1.bf16.msra.mxu0 %v702
    %713 = vmatprep.subr.bf16.mxu0 0
    %714 = vmatpush1.bf16.msra.mxu0 %v701
    %715 = vmatprep.subr.bf16.mxu0 0
    %716 = vmatpush1.bf16.msra.mxu0 %v700
    %717 = vmatprep.subr.bf16.mxu0 0
    %718 = vmatpush1.bf16.msra.mxu0 %v699
    %719 = vmatprep.subr.bf16.mxu0 0
    %720 = vmatpush1.bf16.msra.mxu0 %v698
    %721 = vmatprep.subr.bf16.mxu0 0
    %722 = vmatpush1.bf16.msra.mxu0 %v697
    %723 = vmatprep.subr.bf16.mxu0 0
    %724 = vmatpush1.bf16.msra.mxu0 %v696
    %725 = vmatprep.subr.bf16.mxu0 0
    %726 = vmatpush1.bf16.msra.mxu0 %v695
    %727 = vmatprep.subr.bf16.mxu0 0
    %728 = vmatpush2.bf16.msra.mxu0 0
    %729 = vmatprep.subr.bf16.mxu0 0
    %730 = vmatpush2.bf16.msra.mxu0 0
    %731 = vmatprep.subr.bf16.mxu0 0
    %732 = vmatpush2.bf16.msra.mxu0 0
    %733 = vmatprep.subr.bf16.mxu0 0
    %734 = vmatpush2.bf16.msra.mxu0 0
    %735 = vmatprep.subr.bf16.mxu0 0
    %736 = vmatpush2.bf16.msra.mxu0 0
    %737 = vmatprep.subr.bf16.mxu0 0
    %738 = vmatpush2.bf16.msra.mxu0 0
    %739 = vmatprep.subr.bf16.mxu0 0
    %740 = vmatpush2.bf16.msra.mxu0 0
    %741 = vmatprep.subr.bf16.mxu0 0
    %742 = vmatpush2.bf16.msra.mxu0 0
    %743 = vmatprep.mubr.bf16.mxu0 0
    %744 = vmatmul.mubr.bf16.gmra.mxu0 %v637
    %v745 = vpop.f32.mrf.mxu0
    %v746 = vadd.f32 %v661, %v745
    %v747 = vpop.f32.mrf.mxu0
    %v748 = vpop.f32.mrf.mxu0
    %v749 = vpop.f32.mrf.mxu0
    %750 = vdwg.mxu0
    %vm751 = vcmp.lt.s32.totalorder %v353, 64
    %v752 = vxor.u32 %v746, 2147483648
    %v753 = vmul.f32 %v752, 1.442695
    %v754 = vpow.pop %v753
    %v755 = vadd.f32 %v754, 1.0
    %v756 = vrcp.pop %v755
    %v757 = vmul.f32 1.0, %v756
    %v758 = vsel %vm751, %v757, %v347
    %759 = vst [vmem:[%s3] sm:$0xff] %v758
    // Predicated region
    $region18: #{vae_forward.1} parent=1 // pred_check
      _
    $region19: #{vae_forward.1} parent=1 // pred_check_branch
      %761 = sbr.rel (0) target = $region21
    $region20: #{vae_forward.1} parent=1 // pred_region
      _
    $region21: #{vae_forward.1} parent=1 // pred_fallthru
      _
    // Predicated region
    $region22: #{vae_forward.1} parent=1 // pred_check
      _
    $region23: #{vae_forward.1} parent=1 // pred_check_branch
      %763 = sbr.rel (0) target = $region25
    $region24: #{vae_forward.1} parent=1 // pred_region
      _
    $region25: #{vae_forward.1} parent=1 // pred_fallthru
      _
    %764 = vsyncpa [#allocation3], 1

</llo_original>
